<compile_context>
chip_gen: v7x
topology: tpu7x:2x2x1
jax: 0.10.0
libtpu: 0.0.40
codegen_flags: <defaults>
</compile_context>

<pallas_src>
import functools

import jax
import jax.numpy as jnp
from jax import lax
from jax.experimental import pallas as pl
from jax.experimental.pallas import tpu as pltpu


def _peg_kernel(x_ref, w_ref, b_ref, o_ref, *, H, W, D, k):
    # x_ref: (Bt*H, W*D)  lane-folded input rows (Bt images stacked along sublanes)
    # w_ref: (k*k, W*D)   depthwise weights, pre-tiled across W, W-boundary mask baked in
    # b_ref: (1, W*D)     conv bias, pre-tiled across W
    # o_ref: (Bt*H, W*D)  output rows
    WD = W * D
    p = k // 2
    R = x_ref.shape[0]                                   # Bt * H rows in this block

    x = x_ref[...]                                        # compute dtype == x dtype
    w_all = w_ref[...]                                    # (k*k, WD)
    b = b_ref[...]                                        # (1, WD)

    # Per-image row index (images stacked along the sublane axis).
    row_in_img = lax.broadcasted_iota(jnp.int32, (R, WD), 0) % H

    # Hoisted W-direction shifted windows: windows[dw][r, w*D+d] = x[r, w+dw-p, d].
    # Wrapped lanes carry garbage that is zeroed by the mask baked into w_all, so no
    # lane iota / select is needed here.
    windows = []
    for dw in range(k):
        s = dw - p
        if s == 0:
            windows.append(x)
        else:
            windows.append(pltpu.roll(x, shift=(-s * D) % WD, axis=1))

    # Residual + bias folded into the accumulator (f32 accumulate).
    acc = x.astype(jnp.float32) + b.astype(jnp.float32)

    # For each row offset dh: combine the k lane-shifted windows with their (masked)
    # per-lane taps, then shift the partial sum in H via a sublane roll and mask the
    # rows that crossed an image boundary.
    for dh in range(k):
        r0 = dh * k
        partial = windows[0] * w_all[r0:r0 + 1, :]
        for dw in range(1, k):
            partial = partial + windows[dw] * w_all[r0 + dw:r0 + dw + 1, :]
        partial = partial.astype(jnp.float32)
        t = dh - p
        if t == 0:
            acc = acc + partial
        else:
            shifted = pltpu.roll(partial, shift=(-t) % R, axis=0)
            if t > 0:
                acc = acc + jnp.where(row_in_img < H - t, shifted, 0.0)
            else:
                acc = acc + jnp.where(row_in_img >= -t, shifted, 0.0)

    o_ref[...] = acc.astype(o_ref.dtype)


def peg_forward(x, weight_kkd, bias, *, k=3, target_block_bytes=2 * 1024 * 1024):
    """x: (B, H, W, D) channels-last. weight_kkd: (k, k, D). bias: (D,)."""
    assert k % 2 == 1, "PEG kernel assumes odd k (symmetric 'SAME' padding)"
    B, H, W, D = x.shape
    WD = W * D
    p = k // 2

    # bf16 taps (VPU bf16 on v6e/v7x) with f32 accumulate; f32 otherwise.
    compute_dtype = jnp.bfloat16 if x.dtype == jnp.bfloat16 else jnp.float32

    # ---- layout plumbing only (no padded HBM copy of x) ----
    x2 = x.reshape(B * H, WD)                             # fold W into lanes, B into rows

    # Pre-tiled lane-dense weight rows with the W-boundary ("SAME" zero pad) baked in.
    w_rows = jnp.tile(weight_kkd.reshape(k * k, D).astype(compute_dtype), (1, W))
    wpos = jnp.arange(W)                                  # (W,)
    dw_shift = (jnp.arange(k * k) % k) - p                # (k*k,) = dw - p per row
    valid = ((wpos[None, :] + dw_shift[:, None] >= 0)
             & (wpos[None, :] + dw_shift[:, None] < W))   # (k*k, W)
    w_rows = w_rows * jnp.repeat(valid, D, axis=1).astype(compute_dtype)
    b_row = jnp.tile(bias.reshape(1, D).astype(compute_dtype), (1, W))   # (1, W*D)

    # ---- blocking: pack as many whole images per grid step as fits the target ----
    itemsize = x.dtype.itemsize
    per_img_bytes = H * WD * itemsize
    Bt = 1
    for cand in range(1, B + 1):
        if B % cand == 0 and cand * per_img_bytes <= target_block_bytes:
            Bt = cand
    rows = Bt * H
    block_bytes = rows * WD * itemsize
    # Headroom for double-buffered in/out blocks + f32 window/partial/acc temporaries.
    vmem_limit = int(min(48 * 1024 * 1024, max(32 * 1024 * 1024, 12 * block_bytes)))

    kernel = functools.partial(_peg_kernel, H=H, W=W, D=D, k=k)

    out = pl.pallas_call(
        kernel,
        out_shape=jax.ShapeDtypeStruct((B * H, WD), x.dtype),
        grid_spec=pltpu.PrefetchScalarGridSpec(
            num_scalar_prefetch=0,
            grid=(B // Bt,),
            in_specs=[
                pl.BlockSpec((rows, WD), lambda i: (i, 0)),
                pl.BlockSpec((k * k, WD), lambda i: (0, 0)),
                pl.BlockSpec((1, WD), lambda i: (0, 0)),
            ],
            out_specs=pl.BlockSpec((rows, WD), lambda i: (i, 0)),
        ),
        compiler_params=pltpu.CompilerParams(
            dimension_semantics=("parallel",),
            vmem_limit_bytes=vmem_limit,
        ),
    )(x2, w_rows, b_row)
    return out.reshape(B, H, W, D)


def peg_reference(x, weight_kkd, bias, *, k=3):
    """Pure-JAX reference: depthwise conv (NHWC, SAME) + bias + residual."""
    B, H, W, D = x.shape
    w_hwio = weight_kkd.reshape(k, k, 1, D)
    y = lax.conv_general_dilated(
        x, w_hwio,
        window_strides=(1, 1),
        padding="SAME",
        dimension_numbers=("NHWC", "HWIO", "NHWC"),
        feature_group_count=D,
    )
    return y + bias[None, None, None, :] + x


if __name__ == "__main__":
    B, H, W, D, k = 2, 16, 16, 32, 3

    key = jax.random.PRNGKey(0)
    kx, kw, kb = jax.random.split(key, 3)

    x = jax.random.normal(kx, (B, H, W, D), dtype=jnp.float32)

    # PyTorch Conv2d(dim, dim, k, groups=dim) weight shape is (D, 1, k, k);
    # store it channels-last as (k, k, D).
    w_torch_layout = jax.random.normal(kw, (D, 1, k, k), dtype=jnp.float32) * 0.1
    weight_kkd = jnp.transpose(w_torch_layout[:, 0], (1, 2, 0))  # (k, k, D)
    bias = jax.random.normal(kb, (D,), dtype=jnp.float32) * 0.1

    out = jax.block_until_ready(peg_forward(x, weight_kkd, bias, k=k))

    ref = peg_reference(x, weight_kkd, bias, k=k)
    assert out.shape == (B, H, W, D)
    assert jnp.allclose(out, ref, atol=1e-4, rtol=1e-4), "mismatch vs JAX reference"

    print("KERNEL_OK")
</pallas_src>

<mosaic_0001>
module attributes {stable_mosaic.version = 11 : i64} {
  func.func @_peg_kernel(%arg0: i32, %arg1: memref<32x512xf32, #tpu.memory_space<vmem>>, %arg2: memref<9x512xf32, #tpu.memory_space<vmem>>, %arg3: memref<1x512xf32, #tpu.memory_space<vmem>>, %arg4: memref<32x512xf32, #tpu.memory_space<vmem>>) attributes {dimension_semantics = [#tpu.dimension_semantics<parallel>], iteration_bounds = array<i64: 1>, scalar_prefetch = 0 : i64, scratch_operands = 0 : i64, tpu.core_type = #tpu.core_type<tc>, window_params = [{transform_indices = @transform_0, window_bounds = array<i64: 32, 512>}, {pipeline_mode = #tpu.pipeline_mode<synchronous>, transform_indices = @transform_1, window_bounds = array<i64: 9, 512>}, {pipeline_mode = #tpu.pipeline_mode<synchronous>, transform_indices = @transform_2, window_bounds = array<i64: 1, 512>}, {transform_indices = @transform_3, window_bounds = array<i64: 32, 512>}]} {
    %c0 = arith.constant 0 : index
    %c0_0 = arith.constant 0 : index
    %0 = vector.load %arg1[%c0, %c0_0] : memref<32x512xf32, #tpu.memory_space<vmem>>, vector<32x512xf32>
    %c0_1 = arith.constant 0 : index
    %c0_2 = arith.constant 0 : index
    %1 = vector.load %arg2[%c0_1, %c0_2] : memref<9x512xf32, #tpu.memory_space<vmem>>, vector<9x512xf32>
    %c0_3 = arith.constant 0 : index
    %c0_4 = arith.constant 0 : index
    %2 = vector.load %arg3[%c0_3, %c0_4] : memref<1x512xf32, #tpu.memory_space<vmem>>, vector<1x512xf32>
    %3 = tpu.iota {dimensions = array<i32: 0>} : vector<32x512xi32>
    %c16_i32 = arith.constant 16 : i32
    %c0_i32 = arith.constant 0 : i32
    %4 = arith.cmpi eq, %c16_i32, %c0_i32 : i32
    %c1_i32 = arith.constant 1 : i32
    %5 = arith.select %4, %c1_i32, %c16_i32 : i32
    %6 = vector.broadcast %5 : i32 to vector<32x512xi32>
    %7 = arith.remsi %3, %6 : vector<32x512xi32>
    %c0_i32_5 = arith.constant 0 : i32
    %8 = vector.broadcast %c0_i32_5 : i32 to vector<32x512xi32>
    %9 = arith.cmpi ne, %7, %8 : vector<32x512xi32>
    %c0_i32_6 = arith.constant 0 : i32
    %10 = vector.broadcast %c0_i32_6 : i32 to vector<32x512xi32>
    %11 = arith.cmpi slt, %7, %10 : vector<32x512xi32>
    %c0_i32_7 = arith.constant 0 : i32
    %12 = arith.cmpi slt, %5, %c0_i32_7 : i32
    %13 = vector.broadcast %12 : i1 to vector<32x512xi1>
    %14 = vector.broadcast %13 : vector<32x512xi1> to vector<32x512xi1>
    %15 = arith.xori %11, %14 : vector<32x512xi1>
    %16 = arith.andi %15, %9 : vector<32x512xi1>
    %17 = vector.broadcast %5 : i32 to vector<32x512xi32>
    %18 = arith.addi %7, %17 : vector<32x512xi32>
    %19 = arith.select %16, %18, %7 : vector<32x512xi1>, vector<32x512xi32>
    %c32_i32 = arith.constant 32 : i32
    %20 = tpu.dynamic_rotate %0 by %c32_i32 dim 1 : vector<32x512xf32>, i32 -> vector<32x512xf32>
    %c480_i32 = arith.constant 480 : i32
    %21 = tpu.dynamic_rotate %0 by %c480_i32 dim 1 : vector<32x512xf32>, i32 -> vector<32x512xf32>
    %22 = vector.broadcast %2 : vector<1x512xf32> to vector<32x512xf32>
    %23 = arith.addf %0, %22 : vector<32x512xf32>
    %24 = vector.extract_strided_slice %1 {offsets = [0, 0], sizes = [1, 512], strides = [1, 1]} : vector<9x512xf32> to vector<1x512xf32>
    %25 = vector.broadcast %24 : vector<1x512xf32> to vector<32x512xf32>
    %26 = arith.mulf %20, %25 : vector<32x512xf32>
    %27 = vector.extract_strided_slice %1 {offsets = [1, 0], sizes = [1, 512], strides = [1, 1]} : vector<9x512xf32> to vector<1x512xf32>
    %28 = vector.broadcast %27 : vector<1x512xf32> to vector<32x512xf32>
    %29 = arith.mulf %0, %28 : vector<32x512xf32>
    %30 = arith.addf %26, %29 : vector<32x512xf32>
    %31 = vector.extract_strided_slice %1 {offsets = [2, 0], sizes = [1, 512], strides = [1, 1]} : vector<9x512xf32> to vector<1x512xf32>
    %32 = vector.broadcast %31 : vector<1x512xf32> to vector<32x512xf32>
    %33 = arith.mulf %21, %32 : vector<32x512xf32>
    %34 = arith.addf %30, %33 : vector<32x512xf32>
    %c1_i32_8 = arith.constant 1 : i32
    %35 = tpu.dynamic_rotate %34 by %c1_i32_8 dim 0 : vector<32x512xf32>, i32 -> vector<32x512xf32>
    %c1_i32_9 = arith.constant 1 : i32
    %36 = vector.broadcast %c1_i32_9 : i32 to vector<32x512xi32>
    %37 = arith.cmpi sge, %19, %36 : vector<32x512xi32>
    %cst = arith.constant 0.000000e+00 : f32
    %38 = vector.broadcast %cst : f32 to vector<32x512xf32>
    %39 = arith.select %37, %35, %38 : vector<32x512xi1>, vector<32x512xf32>
    %40 = arith.addf %23, %39 : vector<32x512xf32>
    %41 = vector.extract_strided_slice %1 {offsets = [3, 0], sizes = [1, 512], strides = [1, 1]} : vector<9x512xf32> to vector<1x512xf32>
    %42 = vector.broadcast %41 : vector<1x512xf32> to vector<32x512xf32>
    %43 = arith.mulf %20, %42 : vector<32x512xf32>
    %44 = vector.extract_strided_slice %1 {offsets = [4, 0], sizes = [1, 512], strides = [1, 1]} : vector<9x512xf32> to vector<1x512xf32>
    %45 = vector.broadcast %44 : vector<1x512xf32> to vector<32x512xf32>
    %46 = arith.mulf %0, %45 : vector<32x512xf32>
    %47 = arith.addf %43, %46 : vector<32x512xf32>
    %48 = vector.extract_strided_slice %1 {offsets = [5, 0], sizes = [1, 512], strides = [1, 1]} : vector<9x512xf32> to vector<1x512xf32>
    %49 = vector.broadcast %48 : vector<1x512xf32> to vector<32x512xf32>
    %50 = arith.mulf %21, %49 : vector<32x512xf32>
    %51 = arith.addf %47, %50 : vector<32x512xf32>
    %52 = arith.addf %40, %51 : vector<32x512xf32>
    %53 = vector.extract_strided_slice %1 {offsets = [6, 0], sizes = [1, 512], strides = [1, 1]} : vector<9x512xf32> to vector<1x512xf32>
    %54 = vector.broadcast %53 : vector<1x512xf32> to vector<32x512xf32>
    %55 = arith.mulf %20, %54 : vector<32x512xf32>
    %56 = vector.extract_strided_slice %1 {offsets = [7, 0], sizes = [1, 512], strides = [1, 1]} : vector<9x512xf32> to vector<1x512xf32>
    %57 = vector.broadcast %56 : vector<1x512xf32> to vector<32x512xf32>
    %58 = arith.mulf %0, %57 : vector<32x512xf32>
    %59 = arith.addf %55, %58 : vector<32x512xf32>
    %60 = vector.extract_strided_slice %1 {offsets = [8, 0], sizes = [1, 512], strides = [1, 1]} : vector<9x512xf32> to vector<1x512xf32>
    %61 = vector.broadcast %60 : vector<1x512xf32> to vector<32x512xf32>
    %62 = arith.mulf %21, %61 : vector<32x512xf32>
    %63 = arith.addf %59, %62 : vector<32x512xf32>
    %c31_i32 = arith.constant 31 : i32
    %64 = tpu.dynamic_rotate %63 by %c31_i32 dim 0 : vector<32x512xf32>, i32 -> vector<32x512xf32>
    %c15_i32 = arith.constant 15 : i32
    %65 = vector.broadcast %c15_i32 : i32 to vector<32x512xi32>
    %66 = arith.cmpi slt, %19, %65 : vector<32x512xi32>
    %cst_10 = arith.constant 0.000000e+00 : f32
    %67 = vector.broadcast %cst_10 : f32 to vector<32x512xf32>
    %68 = arith.select %66, %64, %67 : vector<32x512xi1>, vector<32x512xf32>
    %69 = arith.addf %52, %68 : vector<32x512xf32>
    %c0_11 = arith.constant 0 : index
    %c0_12 = arith.constant 0 : index
    %70 = vector.load %arg4[%c0_11, %c0_12] : memref<32x512xf32, #tpu.memory_space<vmem>>, vector<32x512xf32>
    tpu.vector_store %arg4[%c0_11, %c0_12], %69 {strides = array<i32>} : memref<32x512xf32, #tpu.memory_space<vmem>>, vector<32x512xf32>,
    return
  }
  func.func @transform_0(%arg0: i32) -> (i32, i32) {
    %c0_i32 = arith.constant 0 : i32
    %c0_i32_0 = arith.constant 0 : i32
    return %arg0, %c0_i32 : i32, i32
  }
  func.func @transform_1(%arg0: i32) -> (i32, i32) {
    %c0_i32 = arith.constant 0 : i32
    %c0_i32_0 = arith.constant 0 : i32
    %c0_i32_1 = arith.constant 0 : i32
    return %c0_i32, %c0_i32_0 : i32, i32
  }
  func.func @transform_2(%arg0: i32) -> (i32, i32) {
    %c0_i32 = arith.constant 0 : i32
    %c0_i32_0 = arith.constant 0 : i32
    %c0_i32_1 = arith.constant 0 : i32
    return %c0_i32, %c0_i32_0 : i32, i32
  }
  func.func @transform_3(%arg0: i32) -> (i32, i32) {
    %c0_i32 = arith.constant 0 : i32
    %c0_i32_0 = arith.constant 0 : i32
    return %arg0, %c0_i32 : i32, i32
  }
}

</mosaic_0001>

<llo_original>
// kernel: tpu_custom_call.1
$region0: #{tpu_custom_call.1}
  #allocation0 [shape = 'u32[]', space=smem, size = 0x4, offset = 0x4, fixed_abs, tag = 'smem constant byte address 0x4 - core index']
  #allocation1 [shape = 'u32[144,128]{1,0:T(1,128)}', space=vmem, size = 0x12000, scoped, tag = 'internal scratch']
  %s0 = inlined_call_operand.hbm [shape: f32[32,512], index: 0, kind: input, shape index: {}]
  %s1 = inlined_call_operand.hbm [shape: f32[9,512], index: 1, kind: input, shape index: {}]
  %s2 = inlined_call_operand.vmem [shape: f32[1,512], index: 2, kind: input, shape index: {}]
  %s3 = inlined_call_operand.hbm [shape: f32[32,512], index: 3, kind: output, shape index: {}]
  %s4 = sld [smem:[#allocation0]]
  $region30: #{tpu_custom_call.1} parent=0
    _
  %s6 = ssub.s32 1, %s4
  %s7 = scalar_select 0, %s6, %s4
  $region1: #{tpu_custom_call.1} parent=0
    #allocation2 [shape = 'u8[65536]{0}', space=vmem, size = 0x10000, scoped, tag = 'input window, operand 0, single buffered']
    #allocation3 [shape = 's32[1]{0}', space=sflag, size = 0x4, scoped, tag = 'scoped memory for tpu_custom_call.1']
    #allocation4 [shape = 's32[1]{0}', space=sflag, size = 0x4, scoped, tag = 'scoped memory for tpu_custom_call.1']
    #allocation5 [shape = 'u8[32768]{0}', space=vmem, size = 0x8000, scoped, tag = 'input window, operand 1, single buffered']
    #allocation6 [shape = 's32[1]{0}', space=sflag, size = 0x4, scoped, tag = 'scoped memory for tpu_custom_call.1']
    #allocation7 [shape = 'u8[65536]{0}', space=vmem, size = 0x10000, scoped, tag = 'output window, operand 0, single buffered']
    %8 = vsyncpa [#allocation3], 0
    %9 = vsyncpa [#allocation6], 0
    %10 = vsyncpa [#allocation4], 0
    // Predicated region
    $region2: #{tpu_custom_call.1} parent=1 // pred_check
      _
    $region3: #{tpu_custom_call.1} parent=1 // pred_check_branch
      %12 = sbr.rel (0) target = $region5
    $region4: #{tpu_custom_call.1} parent=1 // pred_region
      %s14 = ssub.s32 2048, 2048
      %15 = vsyncadd [#allocation3], %s14
      %s16 = sshll.u32 [#allocation2], 4
      %s17 = int_to_ptr.vmem [resolvable:$true] %s16
      %22 = dma.hbm_to_vmem [thread:$0]  %s0, 2048, %s17, [#allocation3], 512, 512, 32
    $region5: #{tpu_custom_call.1} parent=1 // pred_fallthru
      _
    // Predicated region
    $region6: #{tpu_custom_call.1} parent=1 // pred_check
      _
    $region7: #{tpu_custom_call.1} parent=1 // pred_check_branch
      %24 = sbr.rel (0) target = $region9
    $region8: #{tpu_custom_call.1} parent=1 // pred_region
      %s26 = ssub.s32 1024, 1024
      %27 = vsyncadd [#allocation6], %s26
      %s28 = sshll.u32 [#allocation5], 4
      %s29 = int_to_ptr.vmem [resolvable:$true] %s28
      %34 = dma.hbm_to_vmem [thread:$0]  %s1, 1024, %s29, [#allocation6], 512, 512, 32
    $region9: #{tpu_custom_call.1} parent=1 // pred_fallthru
      _
    // Predicated region
    $region10: #{tpu_custom_call.1} parent=1 // pred_check
      _
    $region11: #{tpu_custom_call.1} parent=1 // pred_check_branch
      %36 = sbr.rel (0) target = $region13
    $region12: #{tpu_custom_call.1} parent=1 // pred_region
      _
    $region13: #{tpu_custom_call.1} parent=1 // pred_fallthru
      _
    // Predicated region
    $region14: #{tpu_custom_call.1} parent=1 // pred_check
      _
    $region15: #{tpu_custom_call.1} parent=1 // pred_check_branch
      %38 = sbr.rel (0) target = $region17
    $region16: #{tpu_custom_call.1} parent=1 // pred_region
      %39 = dma.done [#allocation3], 2048
    $region17: #{tpu_custom_call.1} parent=1 // pred_fallthru
      _
    // Predicated region
    $region18: #{tpu_custom_call.1} parent=1 // pred_check
      _
    $region19: #{tpu_custom_call.1} parent=1 // pred_check_branch
      %41 = sbr.rel (0) target = $region21
    $region20: #{tpu_custom_call.1} parent=1 // pred_region
      %42 = dma.done [#allocation6], 1024
    $region21: #{tpu_custom_call.1} parent=1 // pred_fallthru
      _
    %v43 = vld [vmem:[#allocation2] sm:$0xff]
    %v44 = vld [vmem:[#allocation2 + $0x8] sm:$0xff]
    %v45 = vld [vmem:[#allocation2 + $0x10] sm:$0xff]
    %v46 = vld [vmem:[#allocation2 + $0x18] sm:$0xff]
    %v47 = vld [vmem:[#allocation2 + $0x20] sm:$0xff]
    %v48 = vld [vmem:[#allocation2 + $0x28] sm:$0xff]
    %v49 = vld [vmem:[#allocation2 + $0x30] sm:$0xff]
    %v50 = vld [vmem:[#allocation2 + $0x38] sm:$0xff]
    %v51 = vld [vmem:[#allocation2 + $0x40] sm:$0xff]
    %v52 = vld [vmem:[#allocation2 + $0x48] sm:$0xff]
    %v53 = vld [vmem:[#allocation2 + $0x50] sm:$0xff]
    %v54 = vld [vmem:[#allocation2 + $0x58] sm:$0xff]
    %v55 = vld [vmem:[#allocation2 + $0x60] sm:$0xff]
    %v56 = vld [vmem:[#allocation2 + $0x68] sm:$0xff]
    %v57 = vld [vmem:[#allocation2 + $0x70] sm:$0xff]
    %v58 = vld [vmem:[#allocation2 + $0x78] sm:$0xff]
    %v59 = vld [vmem:[#allocation5] sm:$0xff]
    %v60 = vld [vmem:[#allocation5 + $0x8] sm:$0xff]
    %v61 = vld [vmem:[#allocation5 + $0x10] sm:$0xff]
    %v62 = vld [vmem:[#allocation5 + $0x18] sm:$0xff]
    %v63 = vld [vmem:[#allocation5 + $0x20] sm:$0x1]
    %v64 = vld [vmem:[#allocation5 + $0x28] sm:$0x1]
    %v65 = vld [vmem:[#allocation5 + $0x30] sm:$0x1]
    %v66 = vld [vmem:[#allocation5 + $0x38] sm:$0x1]
    %v67 = vld [vmem:[%s2] sm:$0xf]
    %v68 = vlaneseq
    %v69 = vshrl.u32 %v68, 7
    %v70 = vadd.s32 %v69, 8
    %v71 = vadd.s32 %v69, 16
    %v72 = vadd.s32 %v69, 24
    %vm73 = vcmp.lt.s32.totalorder %v69, 0
    %v74 = vsub.s32 0, %v69
    %v75 = vsel %vm73, %v74, %v69
    %v76 = vshrl.u32 %v75, 4
    %v77 = vand.u32 %v75, 15
    %v78 = vsub.s32 0, %v77
    %v79 = vsel %vm73, %v78, %v77
    %vm80 = vcmp.lt.s32.totalorder %v70, 0
    %v81 = vsub.s32 0, %v70
    %v82 = vsel %vm80, %v81, %v70
    %v83 = vshrl.u32 %v82, 4
    %v84 = vand.u32 %v82, 15
    %v85 = vsub.s32 0, %v84
    %v86 = vsel %vm80, %v85, %v84
    %vm87 = vcmp.lt.s32.totalorder %v71, 0
    %v88 = vsub.s32 0, %v71
    %v89 = vsel %vm87, %v88, %v71
    %v90 = vshrl.u32 %v89, 4
    %v91 = vand.u32 %v89, 15
    %v92 = vsub.s32 0, %v91
    %v93 = vsel %vm87, %v92, %v91
    %vm94 = vcmp.lt.s32.totalorder %v72, 0
    %v95 = vsub.s32 0, %v72
    %v96 = vsel %vm94, %v95, %v72
    %v97 = vshrl.u32 %v96, 4
    %v98 = vand.u32 %v96, 15
    %v99 = vsub.s32 0, %v98
    %v100 = vsel %vm94, %v99, %v98
    %vm101 = vcmp.ne.s32.totalorder %v79, 0
    %vm102 = vcmp.ne.s32.totalorder %v86, 0
    %vm103 = vcmp.ne.s32.totalorder %v93, 0
    %vm104 = vcmp.ne.s32.totalorder %v100, 0
    %vm105 = vcmp.lt.s32.totalorder %v79, 0
    %vm106 = vcmp.lt.s32.totalorder %v86, 0
    %vm107 = vcmp.lt.s32.totalorder %v93, 0
    %vm108 = vcmp.lt.s32.totalorder %v100, 0
    %vm109 = vmand %vm105, %vm101
    %vm110 = vmand %vm106, %vm102
    %vm111 = vmand %vm107, %vm103
    %vm112 = vmand %vm108, %vm104
    %v113 = vadd.s32 %v79, 16
    %v114 = vadd.s32 %v86, 16
    %v115 = vadd.s32 %v93, 16
    %v116 = vadd.s32 %v100, 16
    %v117 = vsel %vm109, %v113, %v79
    %v118 = vsel %vm110, %v114, %v86
    %v119 = vsel %vm111, %v115, %v93
    %v120 = vsel %vm112, %v116, %v100
    %121 = vrot.lane.b32.xlu0 %v43, 32
    %v122 = vpop.permute.xlu0 %121
    %123 = vrot.lane.b32.xlu0 %v47, 32
    %v124 = vpop.permute.xlu0 %123
    %125 = vrot.lane.b32.xlu0 %v51, 32
    %v126 = vpop.permute.xlu0 %125
    %127 = vrot.lane.b32.xlu0 %v55, 32
    %v128 = vpop.permute.xlu0 %127
    %129 = vrot.lane.b32.xlu0 %v44, 32
    %v130 = vpop.permute.xlu0 %129
    %131 = vrot.lane.b32.xlu0 %v48, 32
    %v132 = vpop.permute.xlu0 %131
    %133 = vrot.lane.b32.xlu0 %v52, 32
    %v134 = vpop.permute.xlu0 %133
    %135 = vrot.lane.b32.xlu0 %v56, 32
    %v136 = vpop.permute.xlu0 %135
    %137 = vrot.lane.b32.xlu0 %v45, 32
    %v138 = vpop.permute.xlu0 %137
    %139 = vrot.lane.b32.xlu0 %v49, 32
    %v140 = vpop.permute.xlu0 %139
    %141 = vrot.lane.b32.xlu0 %v53, 32
    %v142 = vpop.permute.xlu0 %141
    %143 = vrot.lane.b32.xlu0 %v57, 32
    %v144 = vpop.permute.xlu0 %143
    %145 = vrot.lane.b32.xlu0 %v46, 32
    %v146 = vpop.permute.xlu0 %145
    %147 = vrot.lane.b32.xlu0 %v50, 32
    %v148 = vpop.permute.xlu0 %147
    %149 = vrot.lane.b32.xlu0 %v54, 32
    %v150 = vpop.permute.xlu0 %149
    %151 = vrot.lane.b32.xlu0 %v58, 32
    %v152 = vpop.permute.xlu0 %151
    %v153 = vlaneseq
    %v154 = vand.u32 %v153, 127
    %vm155 = vcmp.lt.s32.totalorder %v154, 32
    %v156 = vsel %vm155, %v138, %v146
    %v157 = vsel %vm155, %v140, %v148
    %v158 = vsel %vm155, %v142, %v150
    %v159 = vsel %vm155, %v144, %v152
    %v160 = vsel %vm155, %v130, %v138
    %v161 = vsel %vm155, %v132, %v140
    %v162 = vsel %vm155, %v134, %v142
    %v163 = vsel %vm155, %v136, %v144
    %v164 = vsel %vm155, %v122, %v130
    %v165 = vsel %vm155, %v124, %v132
    %v166 = vsel %vm155, %v126, %v134
    %v167 = vsel %vm155, %v128, %v136
    %v168 = vsel %vm155, %v146, %v122
    %v169 = vsel %vm155, %v148, %v124
    %v170 = vsel %vm155, %v150, %v126
    %v171 = vsel %vm155, %v152, %v128
    %172 = vrot.lane.b32.xlu0 %v43, 96
    %v173 = vpop.permute.xlu0 %172
    %174 = vrot.lane.b32.xlu0 %v47, 96
    %v175 = vpop.permute.xlu0 %174
    %176 = vrot.lane.b32.xlu0 %v51, 96
    %v177 = vpop.permute.xlu0 %176
    %178 = vrot.lane.b32.xlu0 %v55, 96
    %v179 = vpop.permute.xlu0 %178
    %180 = vrot.lane.b32.xlu0 %v44, 96
    %v181 = vpop.permute.xlu0 %180
    %182 = vrot.lane.b32.xlu0 %v48, 96
    %v183 = vpop.permute.xlu0 %182
    %184 = vrot.lane.b32.xlu0 %v52, 96
    %v185 = vpop.permute.xlu0 %184
    %186 = vrot.lane.b32.xlu0 %v56, 96
    %v187 = vpop.permute.xlu0 %186
    %188 = vrot.lane.b32.xlu0 %v45, 96
    %v189 = vpop.permute.xlu0 %188
    %190 = vrot.lane.b32.xlu0 %v49, 96
    %v191 = vpop.permute.xlu0 %190
    %192 = vrot.lane.b32.xlu0 %v53, 96
    %v193 = vpop.permute.xlu0 %192
    %194 = vrot.lane.b32.xlu0 %v57, 96
    %v195 = vpop.permute.xlu0 %194
    %196 = vrot.lane.b32.xlu0 %v46, 96
    %v197 = vpop.permute.xlu0 %196
    %198 = vrot.lane.b32.xlu0 %v50, 96
    %v199 = vpop.permute.xlu0 %198
    %200 = vrot.lane.b32.xlu0 %v54, 96
    %v201 = vpop.permute.xlu0 %200
    %202 = vrot.lane.b32.xlu0 %v58, 96
    %v203 = vpop.permute.xlu0 %202
    %vm204 = vcmp.lt.s32.totalorder %v154, 96
    %v205 = vsel %vm204, %v189, %v197
    %v206 = vsel %vm204, %v191, %v199
    %v207 = vsel %vm204, %v193, %v201
    %v208 = vsel %vm204, %v195, %v203
    %v209 = vsel %vm204, %v181, %v189
    %v210 = vsel %vm204, %v183, %v191
    %v211 = vsel %vm204, %v185, %v193
    %v212 = vsel %vm204, %v187, %v195
    %v213 = vsel %vm204, %v173, %v181
    %v214 = vsel %vm204, %v175, %v183
    %v215 = vsel %vm204, %v177, %v185
    %v216 = vsel %vm204, %v179, %v187
    %v217 = vsel %vm204, %v197, %v173
    %v218 = vsel %vm204, %v199, %v175
    %v219 = vsel %vm204, %v201, %v177
    %v220 = vsel %vm204, %v203, %v179
    %v222 = vlaneseq
    %v223 = vshrl.u32 %v222, 7
    %v224 = vsub.s32 0, %v223
    %v225 = vrot.slane %v67, %v224
    %v226 = vlaneseq
    %v227 = vshrl.u32 %v226, 7
    %v228 = vsub.s32 1, %v227
    %v229 = vrot.slane %v67, %v228
    %v230 = vlaneseq
    %v231 = vshrl.u32 %v230, 7
    %v232 = vsub.s32 2, %v231
    %v233 = vrot.slane %v67, %v232
    %v234 = vlaneseq
    %v235 = vshrl.u32 %v234, 7
    %v236 = vsub.s32 3, %v235
    %v237 = vrot.slane %v67, %v236
    %v242 = vadd.f32 %v43, %v225
    %v243 = vadd.f32 %v44, %v229
    %v244 = vadd.f32 %v45, %v233
    %v245 = vadd.f32 %v46, %v237
    %v246 = vadd.f32 %v47, %v225
    %v247 = vadd.f32 %v48, %v229
    %v248 = vadd.f32 %v49, %v233
    %v249 = vadd.f32 %v50, %v237
    %v250 = vadd.f32 %v51, %v225
    %v251 = vadd.f32 %v52, %v229
    %v252 = vadd.f32 %v53, %v233
    %v253 = vadd.f32 %v54, %v237
    %v254 = vadd.f32 %v55, %v225
    %v255 = vadd.f32 %v56, %v229
    %v256 = vadd.f32 %v57, %v233
    %v257 = vadd.f32 %v58, %v237
    %v258 = vlaneseq
    %v259 = vshrl.u32 %v258, 7
    %v260 = vsub.s32 0, %v259
    %v261 = vrot.slane %v59, %v260
    %v262 = vlaneseq
    %v263 = vshrl.u32 %v262, 7
    %v264 = vsub.s32 0, %v263
    %v265 = vrot.slane %v60, %v264
    %v266 = vlaneseq
    %v267 = vshrl.u32 %v266, 7
    %v268 = vsub.s32 0, %v267
    %v269 = vrot.slane %v61, %v268
    %v270 = vlaneseq
    %v271 = vshrl.u32 %v270, 7
    %v272 = vsub.s32 0, %v271
    %v273 = vrot.slane %v62, %v272
    %v274 = vmul.f32 %v168, %v261
    %v275 = vmul.f32 %v164, %v265
    %v276 = vmul.f32 %v160, %v269
    %v277 = vmul.f32 %v156, %v273
    %v278 = vmul.f32 %v169, %v261
    %v279 = vmul.f32 %v165, %v265
    %v280 = vmul.f32 %v161, %v269
    %v281 = vmul.f32 %v157, %v273
    %v282 = vmul.f32 %v170, %v261
    %v283 = vmul.f32 %v166, %v265
    %v284 = vmul.f32 %v162, %v269
    %v285 = vmul.f32 %v158, %v273
    %v286 = vmul.f32 %v171, %v261
    %v287 = vmul.f32 %v167, %v265
    %v288 = vmul.f32 %v163, %v269
    %v289 = vmul.f32 %v159, %v273
    %v290 = vlaneseq
    %v291 = vshrl.u32 %v290, 7
    %v292 = vsub.s32 1, %v291
    %v293 = vrot.slane %v59, %v292
    %v294 = vlaneseq
    %v295 = vshrl.u32 %v294, 7
    %v296 = vsub.s32 1, %v295
    %v297 = vrot.slane %v60, %v296
    %v298 = vlaneseq
    %v299 = vshrl.u32 %v298, 7
    %v300 = vsub.s32 1, %v299
    %v301 = vrot.slane %v61, %v300
    %v302 = vlaneseq
    %v303 = vshrl.u32 %v302, 7
    %v304 = vsub.s32 1, %v303
    %v305 = vrot.slane %v62, %v304
    %v306 = vmul.f32 %v43, %v293
    %v307 = vmul.f32 %v44, %v297
    %v308 = vmul.f32 %v45, %v301
    %v309 = vmul.f32 %v46, %v305
    %v310 = vmul.f32 %v47, %v293
    %v311 = vmul.f32 %v48, %v297
    %v312 = vmul.f32 %v49, %v301
    %v313 = vmul.f32 %v50, %v305
    %v314 = vmul.f32 %v51, %v293
    %v315 = vmul.f32 %v52, %v297
    %v316 = vmul.f32 %v53, %v301
    %v317 = vmul.f32 %v54, %v305
    %v318 = vmul.f32 %v55, %v293
    %v319 = vmul.f32 %v56, %v297
    %v320 = vmul.f32 %v57, %v301
    %v321 = vmul.f32 %v58, %v305
    %v322 = vadd.f32 %v274, %v306
    %v323 = vadd.f32 %v275, %v307
    %v324 = vadd.f32 %v276, %v308
    %v325 = vadd.f32 %v277, %v309
    %v326 = vadd.f32 %v278, %v310
    %v327 = vadd.f32 %v279, %v311
    %v328 = vadd.f32 %v280, %v312
    %v329 = vadd.f32 %v281, %v313
    %v330 = vadd.f32 %v282, %v314
    %v331 = vadd.f32 %v283, %v315
    %v332 = vadd.f32 %v284, %v316
    %v333 = vadd.f32 %v285, %v317
    %v334 = vadd.f32 %v286, %v318
    %v335 = vadd.f32 %v287, %v319
    %v336 = vadd.f32 %v288, %v320
    %v337 = vadd.f32 %v289, %v321
    %v338 = vlaneseq
    %v339 = vshrl.u32 %v338, 7
    %v340 = vsub.s32 2, %v339
    %v341 = vrot.slane %v59, %v340
    %v342 = vlaneseq
    %v343 = vshrl.u32 %v342, 7
    %v344 = vsub.s32 2, %v343
    %v345 = vrot.slane %v60, %v344
    %v346 = vlaneseq
    %v347 = vshrl.u32 %v346, 7
    %v348 = vsub.s32 2, %v347
    %v349 = vrot.slane %v61, %v348
    %v350 = vlaneseq
    %v351 = vshrl.u32 %v350, 7
    %v352 = vsub.s32 2, %v351
    %v353 = vrot.slane %v62, %v352
    %v354 = vmul.f32 %v213, %v341
    %v355 = vmul.f32 %v209, %v345
    %v356 = vmul.f32 %v205, %v349
    %v357 = vmul.f32 %v217, %v353
    %v358 = vmul.f32 %v214, %v341
    %v359 = vmul.f32 %v210, %v345
    %v360 = vmul.f32 %v206, %v349
    %v361 = vmul.f32 %v218, %v353
    %v362 = vmul.f32 %v215, %v341
    %v363 = vmul.f32 %v211, %v345
    %v364 = vmul.f32 %v207, %v349
    %v365 = vmul.f32 %v219, %v353
    %v366 = vmul.f32 %v216, %v341
    %v367 = vmul.f32 %v212, %v345
    %v368 = vmul.f32 %v208, %v349
    %v369 = vmul.f32 %v220, %v353
    %v370 = vadd.f32 %v322, %v354
    %v371 = vadd.f32 %v323, %v355
    %v372 = vadd.f32 %v324, %v356
    %v373 = vadd.f32 %v325, %v357
    %v374 = vadd.f32 %v326, %v358
    %v375 = vadd.f32 %v327, %v359
    %v376 = vadd.f32 %v328, %v360
    %v377 = vadd.f32 %v329, %v361
    %v378 = vadd.f32 %v330, %v362
    %v379 = vadd.f32 %v331, %v363
    %v380 = vadd.f32 %v332, %v364
    %v381 = vadd.f32 %v333, %v365
    %v382 = vadd.f32 %v334, %v366
    %v383 = vadd.f32 %v335, %v367
    %v384 = vadd.f32 %v336, %v368
    %v385 = vadd.f32 %v337, %v369
    %v386 = vrot.slane %v370, 7
    %v387 = vrot.slane %v371, 7
    %v388 = vrot.slane %v372, 7
    %v389 = vrot.slane %v373, 7
    %v390 = vrot.slane %v374, 7
    %v391 = vrot.slane %v375, 7
    %v392 = vrot.slane %v376, 7
    %v393 = vrot.slane %v377, 7
    %v394 = vrot.slane %v378, 7
    %v395 = vrot.slane %v379, 7
    %v396 = vrot.slane %v380, 7
    %v397 = vrot.slane %v381, 7
    %v398 = vrot.slane %v382, 7
    %v399 = vrot.slane %v383, 7
    %v400 = vrot.slane %v384, 7
    %v401 = vrot.slane %v385, 7
    %vm402 = vcmp.lt.s32.totalorder %v69, 1
    %v403 = vsel %vm402, %v394, %v398
    %v404 = vsel %vm402, %v395, %v399
    %v405 = vsel %vm402, %v396, %v400
    %v406 = vsel %vm402, %v397, %v401
    %v407 = vsel %vm402, %v390, %v394
    %v408 = vsel %vm402, %v391, %v395
    %v409 = vsel %vm402, %v392, %v396
    %v410 = vsel %vm402, %v393, %v397
    %v411 = vsel %vm402, %v386, %v390
    %v412 = vsel %vm402, %v387, %v391
    %v413 = vsel %vm402, %v388, %v392
    %v414 = vsel %vm402, %v389, %v393
    %v415 = vsel %vm402, %v398, %v386
    %v416 = vsel %vm402, %v399, %v387
    %v417 = vsel %vm402, %v400, %v388
    %v418 = vsel %vm402, %v401, %v389
    %vm419 = vcmp.ge.s32.totalorder %v117, 1
    %vm420 = vcmp.ge.s32.totalorder %v118, 1
    %vm421 = vcmp.ge.s32.totalorder %v119, 1
    %vm422 = vcmp.ge.s32.totalorder %v120, 1
    %v423 = vsel %vm419, %v415, 0.0
    %v424 = vsel %vm419, %v416, 0.0
    %v425 = vsel %vm419, %v417, 0.0
    %v426 = vsel %vm419, %v418, 0.0
    %v427 = vsel %vm420, %v411, 0.0
    %v428 = vsel %vm420, %v412, 0.0
    %v429 = vsel %vm420, %v413, 0.0
    %v430 = vsel %vm420, %v414, 0.0
    %v431 = vsel %vm421, %v407, 0.0
    %v432 = vsel %vm421, %v408, 0.0
    %v433 = vsel %vm421, %v409, 0.0
    %v434 = vsel %vm421, %v410, 0.0
    %v435 = vsel %vm422, %v403, 0.0
    %v436 = vsel %vm422, %v404, 0.0
    %v437 = vsel %vm422, %v405, 0.0
    %v438 = vsel %vm422, %v406, 0.0
    %v439 = vadd.f32 %v242, %v423
    %v440 = vadd.f32 %v243, %v424
    %v441 = vadd.f32 %v244, %v425
    %v442 = vadd.f32 %v245, %v426
    %v443 = vadd.f32 %v246, %v427
    %v444 = vadd.f32 %v247, %v428
    %v445 = vadd.f32 %v248, %v429
    %v446 = vadd.f32 %v249, %v430
    %v447 = vadd.f32 %v250, %v431
    %v448 = vadd.f32 %v251, %v432
    %v449 = vadd.f32 %v252, %v433
    %v450 = vadd.f32 %v253, %v434
    %v451 = vadd.f32 %v254, %v435
    %v452 = vadd.f32 %v255, %v436
    %v453 = vadd.f32 %v256, %v437
    %v454 = vadd.f32 %v257, %v438
    %v455 = vlaneseq
    %v456 = vshrl.u32 %v455, 7
    %v457 = vsub.s32 3, %v456
    %v458 = vrot.slane %v59, %v457
    %v459 = vlaneseq
    %v460 = vshrl.u32 %v459, 7
    %v461 = vsub.s32 3, %v460
    %v462 = vrot.slane %v60, %v461
    %v463 = vlaneseq
    %v464 = vshrl.u32 %v463, 7
    %v465 = vsub.s32 3, %v464
    %v466 = vrot.slane %v61, %v465
    %v467 = vlaneseq
    %v468 = vshrl.u32 %v467, 7
    %v469 = vsub.s32 3, %v468
    %v470 = vrot.slane %v62, %v469
    %v471 = vmul.f32 %v168, %v458
    %v472 = vmul.f32 %v164, %v462
    %v473 = vmul.f32 %v160, %v466
    %v474 = vmul.f32 %v156, %v470
    %v475 = vmul.f32 %v169, %v458
    %v476 = vmul.f32 %v165, %v462
    %v477 = vmul.f32 %v161, %v466
    %v478 = vmul.f32 %v157, %v470
    %v479 = vmul.f32 %v170, %v458
    %v480 = vmul.f32 %v166, %v462
    %v481 = vmul.f32 %v162, %v466
    %v482 = vmul.f32 %v158, %v470
    %v483 = vmul.f32 %v171, %v458
    %v484 = vmul.f32 %v167, %v462
    %v485 = vmul.f32 %v163, %v466
    %v486 = vmul.f32 %v159, %v470
    %v487 = vlaneseq
    %v488 = vshrl.u32 %v487, 7
    %v489 = vsub.s32 4, %v488
    %v490 = vrot.slane %v59, %v489
    %v491 = vlaneseq
    %v492 = vshrl.u32 %v491, 7
    %v493 = vsub.s32 4, %v492
    %v494 = vrot.slane %v60, %v493
    %v495 = vlaneseq
    %v496 = vshrl.u32 %v495, 7
    %v497 = vsub.s32 4, %v496
    %v498 = vrot.slane %v61, %v497
    %v499 = vlaneseq
    %v500 = vshrl.u32 %v499, 7
    %v501 = vsub.s32 4, %v500
    %v502 = vrot.slane %v62, %v501
    %v503 = vmul.f32 %v43, %v490
    %v504 = vmul.f32 %v44, %v494
    %v505 = vmul.f32 %v45, %v498
    %v506 = vmul.f32 %v46, %v502
    %v507 = vmul.f32 %v47, %v490
    %v508 = vmul.f32 %v48, %v494
    %v509 = vmul.f32 %v49, %v498
    %v510 = vmul.f32 %v50, %v502
    %v511 = vmul.f32 %v51, %v490
    %v512 = vmul.f32 %v52, %v494
    %v513 = vmul.f32 %v53, %v498
    %v514 = vmul.f32 %v54, %v502
    %v515 = vmul.f32 %v55, %v490
    %v516 = vmul.f32 %v56, %v494
    %v517 = vmul.f32 %v57, %v498
    %v518 = vmul.f32 %v58, %v502
    %v519 = vadd.f32 %v471, %v503
    %v520 = vadd.f32 %v472, %v504
    %v521 = vadd.f32 %v473, %v505
    %v522 = vadd.f32 %v474, %v506
    %v523 = vadd.f32 %v475, %v507
    %v524 = vadd.f32 %v476, %v508
    %v525 = vadd.f32 %v477, %v509
    %v526 = vadd.f32 %v478, %v510
    %v527 = vadd.f32 %v479, %v511
    %v528 = vadd.f32 %v480, %v512
    %v529 = vadd.f32 %v481, %v513
    %v530 = vadd.f32 %v482, %v514
    %v531 = vadd.f32 %v483, %v515
    %v532 = vadd.f32 %v484, %v516
    %v533 = vadd.f32 %v485, %v517
    %v534 = vadd.f32 %v486, %v518
    %v535 = vlaneseq
    %v536 = vshrl.u32 %v535, 7
    %v537 = vsub.s32 5, %v536
    %v538 = vrot.slane %v59, %v537
    %v539 = vlaneseq
    %v540 = vshrl.u32 %v539, 7
    %v541 = vsub.s32 5, %v540
    %v542 = vrot.slane %v60, %v541
    %v543 = vlaneseq
    %v544 = vshrl.u32 %v543, 7
    %v545 = vsub.s32 5, %v544
    %v546 = vrot.slane %v61, %v545
    %v547 = vlaneseq
    %v548 = vshrl.u32 %v547, 7
    %v549 = vsub.s32 5, %v548
    %v550 = vrot.slane %v62, %v549
    %v551 = vmul.f32 %v213, %v538
    %v552 = vmul.f32 %v209, %v542
    %v553 = vmul.f32 %v205, %v546
    %v554 = vmul.f32 %v217, %v550
    %v555 = vmul.f32 %v214, %v538
    %v556 = vmul.f32 %v210, %v542
    %v557 = vmul.f32 %v206, %v546
    %v558 = vmul.f32 %v218, %v550
    %v559 = vmul.f32 %v215, %v538
    %v560 = vmul.f32 %v211, %v542
    %v561 = vmul.f32 %v207, %v546
    %v562 = vmul.f32 %v219, %v550
    %v563 = vmul.f32 %v216, %v538
    %v564 = vmul.f32 %v212, %v542
    %v565 = vmul.f32 %v208, %v546
    %v566 = vmul.f32 %v220, %v550
    %v567 = vadd.f32 %v519, %v551
    %v568 = vadd.f32 %v520, %v552
    %v569 = vadd.f32 %v521, %v553
    %v570 = vadd.f32 %v522, %v554
    %v571 = vadd.f32 %v523, %v555
    %v572 = vadd.f32 %v524, %v556
    %v573 = vadd.f32 %v525, %v557
    %v574 = vadd.f32 %v526, %v558
    %v575 = vadd.f32 %v527, %v559
    %v576 = vadd.f32 %v528, %v560
    %v577 = vadd.f32 %v529, %v561
    %v578 = vadd.f32 %v530, %v562
    %v579 = vadd.f32 %v531, %v563
    %v580 = vadd.f32 %v532, %v564
    %v581 = vadd.f32 %v533, %v565
    %v582 = vadd.f32 %v534, %v566
    %v583 = vadd.f32 %v439, %v567
    %v584 = vadd.f32 %v440, %v568
    %v585 = vadd.f32 %v441, %v569
    %v586 = vadd.f32 %v442, %v570
    %v587 = vadd.f32 %v443, %v571
    %v588 = vadd.f32 %v444, %v572
    %v589 = vadd.f32 %v445, %v573
    %v590 = vadd.f32 %v446, %v574
    %v591 = vadd.f32 %v447, %v575
    %v592 = vadd.f32 %v448, %v576
    %v593 = vadd.f32 %v449, %v577
    %v594 = vadd.f32 %v450, %v578
    %v595 = vadd.f32 %v451, %v579
    %v596 = vadd.f32 %v452, %v580
    %v597 = vadd.f32 %v453, %v581
    %v598 = vadd.f32 %v454, %v582
    %v599 = vlaneseq
    %v600 = vshrl.u32 %v599, 7
    %v601 = vsub.s32 6, %v600
    %v602 = vrot.slane %v59, %v601
    %v603 = vlaneseq
    %v604 = vshrl.u32 %v603, 7
    %v605 = vsub.s32 6, %v604
    %v606 = vrot.slane %v60, %v605
    %v607 = vlaneseq
    %v608 = vshrl.u32 %v607, 7
    %v609 = vsub.s32 6, %v608
    %v610 = vrot.slane %v61, %v609
    %v611 = vlaneseq
    %v612 = vshrl.u32 %v611, 7
    %v613 = vsub.s32 6, %v612
    %v614 = vrot.slane %v62, %v613
    %v615 = vmul.f32 %v168, %v602
    %v616 = vmul.f32 %v164, %v606
    %v617 = vmul.f32 %v160, %v610
    %v618 = vmul.f32 %v156, %v614
    %v619 = vmul.f32 %v169, %v602
    %v620 = vmul.f32 %v165, %v606
    %v621 = vmul.f32 %v161, %v610
    %v622 = vmul.f32 %v157, %v614
    %v623 = vmul.f32 %v170, %v602
    %v624 = vmul.f32 %v166, %v606
    %v625 = vmul.f32 %v162, %v610
    %v626 = vmul.f32 %v158, %v614
    %v627 = vmul.f32 %v171, %v602
    %v628 = vmul.f32 %v167, %v606
    %v629 = vmul.f32 %v163, %v610
    %v630 = vmul.f32 %v159, %v614
    %v631 = vlaneseq
    %v632 = vshrl.u32 %v631, 7
    %v633 = vsub.s32 7, %v632
    %v634 = vrot.slane %v59, %v633
    %v635 = vlaneseq
    %v636 = vshrl.u32 %v635, 7
    %v637 = vsub.s32 7, %v636
    %v638 = vrot.slane %v60, %v637
    %v639 = vlaneseq
    %v640 = vshrl.u32 %v639, 7
    %v641 = vsub.s32 7, %v640
    %v642 = vrot.slane %v61, %v641
    %v643 = vlaneseq
    %v644 = vshrl.u32 %v643, 7
    %v645 = vsub.s32 7, %v644
    %v646 = vrot.slane %v62, %v645
    %v647 = vmul.f32 %v43, %v634
    %v648 = vmul.f32 %v44, %v638
    %v649 = vmul.f32 %v45, %v642
    %v650 = vmul.f32 %v46, %v646
    %v651 = vmul.f32 %v47, %v634
    %v652 = vmul.f32 %v48, %v638
    %v653 = vmul.f32 %v49, %v642
    %v654 = vmul.f32 %v50, %v646
    %v655 = vmul.f32 %v51, %v634
    %v656 = vmul.f32 %v52, %v638
    %v657 = vmul.f32 %v53, %v642
    %v658 = vmul.f32 %v54, %v646
    %v659 = vmul.f32 %v55, %v634
    %v660 = vmul.f32 %v56, %v638
    %v661 = vmul.f32 %v57, %v642
    %v662 = vmul.f32 %v58, %v646
    %v663 = vadd.f32 %v615, %v647
    %v664 = vadd.f32 %v616, %v648
    %v665 = vadd.f32 %v617, %v649
    %v666 = vadd.f32 %v618, %v650
    %v667 = vadd.f32 %v619, %v651
    %v668 = vadd.f32 %v620, %v652
    %v669 = vadd.f32 %v621, %v653
    %v670 = vadd.f32 %v622, %v654
    %v671 = vadd.f32 %v623, %v655
    %v672 = vadd.f32 %v624, %v656
    %v673 = vadd.f32 %v625, %v657
    %v674 = vadd.f32 %v626, %v658
    %v675 = vadd.f32 %v627, %v659
    %v676 = vadd.f32 %v628, %v660
    %v677 = vadd.f32 %v629, %v661
    %v678 = vadd.f32 %v630, %v662
    %v679 = vlaneseq
    %v680 = vshrl.u32 %v679, 7
    %v681 = vsub.s32 0, %v680
    %v682 = vrot.slane %v63, %v681
    %v683 = vlaneseq
    %v684 = vshrl.u32 %v683, 7
    %v685 = vsub.s32 0, %v684
    %v686 = vrot.slane %v64, %v685
    %v687 = vlaneseq
    %v688 = vshrl.u32 %v687, 7
    %v689 = vsub.s32 0, %v688
    %v690 = vrot.slane %v65, %v689
    %v691 = vlaneseq
    %v692 = vshrl.u32 %v691, 7
    %v693 = vsub.s32 0, %v692
    %v694 = vrot.slane %v66, %v693
    %v695 = vmul.f32 %v213, %v682
    %v696 = vmul.f32 %v209, %v686
    %v697 = vmul.f32 %v205, %v690
    %v698 = vmul.f32 %v217, %v694
    %v699 = vmul.f32 %v214, %v682
    %v700 = vmul.f32 %v210, %v686
    %v701 = vmul.f32 %v206, %v690
    %v702 = vmul.f32 %v218, %v694
    %v703 = vmul.f32 %v215, %v682
    %v704 = vmul.f32 %v211, %v686
    %v705 = vmul.f32 %v207, %v690
    %v706 = vmul.f32 %v219, %v694
    %v707 = vmul.f32 %v216, %v682
    %v708 = vmul.f32 %v212, %v686
    %v709 = vmul.f32 %v208, %v690
    %v710 = vmul.f32 %v220, %v694
    %v711 = vadd.f32 %v663, %v695
    %v712 = vadd.f32 %v664, %v696
    %v713 = vadd.f32 %v665, %v697
    %v714 = vadd.f32 %v666, %v698
    %v715 = vadd.f32 %v667, %v699
    %v716 = vadd.f32 %v668, %v700
    %v717 = vadd.f32 %v669, %v701
    %v718 = vadd.f32 %v670, %v702
    %v719 = vadd.f32 %v671, %v703
    %v720 = vadd.f32 %v672, %v704
    %v721 = vadd.f32 %v673, %v705
    %v722 = vadd.f32 %v674, %v706
    %v723 = vadd.f32 %v675, %v707
    %v724 = vadd.f32 %v676, %v708
    %v725 = vadd.f32 %v677, %v709
    %v726 = vadd.f32 %v678, %v710
    %v727 = vrot.slane %v711, 1
    %v728 = vrot.slane %v712, 1
    %v729 = vrot.slane %v713, 1
    %v730 = vrot.slane %v714, 1
    %v731 = vrot.slane %v715, 1
    %v732 = vrot.slane %v716, 1
    %v733 = vrot.slane %v717, 1
    %v734 = vrot.slane %v718, 1
    %v735 = vrot.slane %v719, 1
    %v736 = vrot.slane %v720, 1
    %v737 = vrot.slane %v721, 1
    %v738 = vrot.slane %v722, 1
    %v739 = vrot.slane %v723, 1
    %v740 = vrot.slane %v724, 1
    %v741 = vrot.slane %v725, 1
    %v742 = vrot.slane %v726, 1
    %vm743 = vcmp.lt.s32.totalorder %v69, 7
    %v744 = vsel %vm743, %v735, %v739
    %v745 = vsel %vm743, %v736, %v740
    %v746 = vsel %vm743, %v737, %v741
    %v747 = vsel %vm743, %v738, %v742
    %v748 = vsel %vm743, %v731, %v735
    %v749 = vsel %vm743, %v732, %v736
    %v750 = vsel %vm743, %v733, %v737
    %v751 = vsel %vm743, %v734, %v738
    %v752 = vsel %vm743, %v727, %v731
    %v753 = vsel %vm743, %v728, %v732
    %v754 = vsel %vm743, %v729, %v733
    %v755 = vsel %vm743, %v730, %v734
    %v756 = vsel %vm743, %v739, %v727
    %v757 = vsel %vm743, %v740, %v728
    %v758 = vsel %vm743, %v741, %v729
    %v759 = vsel %vm743, %v742, %v730
    %vm760 = vcmp.lt.s32.totalorder %v117, 15
    %vm761 = vcmp.lt.s32.totalorder %v118, 15
    %vm762 = vcmp.lt.s32.totalorder %v119, 15
    %vm763 = vcmp.lt.s32.totalorder %v120, 15
    %v764 = vsel %vm760, %v752, 0.0
    %v765 = vsel %vm760, %v753, 0.0
    %v766 = vsel %vm760, %v754, 0.0
    %v767 = vsel %vm760, %v755, 0.0
    %v768 = vsel %vm761, %v748, 0.0
    %v769 = vsel %vm761, %v749, 0.0
    %v770 = vsel %vm761, %v750, 0.0
    %v771 = vsel %vm761, %v751, 0.0
    %v772 = vsel %vm762, %v744, 0.0
    %v773 = vsel %vm762, %v745, 0.0
    %v774 = vsel %vm762, %v746, 0.0
    %v775 = vsel %vm762, %v747, 0.0
    %v776 = vsel %vm763, %v756, 0.0
    %v777 = vsel %vm763, %v757, 0.0
    %v778 = vsel %vm763, %v758, 0.0
    %v779 = vsel %vm763, %v759, 0.0
    %v780 = vadd.f32 %v583, %v764
    %v781 = vadd.f32 %v584, %v765
    %v782 = vadd.f32 %v585, %v766
    %v783 = vadd.f32 %v586, %v767
    %v784 = vadd.f32 %v587, %v768
    %v785 = vadd.f32 %v588, %v769
    %v786 = vadd.f32 %v589, %v770
    %v787 = vadd.f32 %v590, %v771
    %v788 = vadd.f32 %v591, %v772
    %v789 = vadd.f32 %v592, %v773
    %v790 = vadd.f32 %v593, %v774
    %v791 = vadd.f32 %v594, %v775
    %v792 = vadd.f32 %v595, %v776
    %v793 = vadd.f32 %v596, %v777
    %v794 = vadd.f32 %v597, %v778
    %v795 = vadd.f32 %v598, %v779
    %796 = vst [vmem:[#allocation7] sm:$0xff] %v780
    %797 = vst [vmem:[#allocation7 + $0x8] sm:$0xff] %v781
    %798 = vst [vmem:[#allocation7 + $0x10] sm:$0xff] %v782
    %799 = vst [vmem:[#allocation7 + $0x18] sm:$0xff] %v783
    %800 = vst [vmem:[#allocation7 + $0x20] sm:$0xff] %v784
    %801 = vst [vmem:[#allocation7 + $0x28] sm:$0xff] %v785
    %802 = vst [vmem:[#allocation7 + $0x30] sm:$0xff] %v786
    %803 = vst [vmem:[#allocation7 + $0x38] sm:$0xff] %v787
    %804 = vst [vmem:[#allocation7 + $0x40] sm:$0xff] %v788
    %805 = vst [vmem:[#allocation7 + $0x48] sm:$0xff] %v789
    %806 = vst [vmem:[#allocation7 + $0x50] sm:$0xff] %v790
    %807 = vst [vmem:[#allocation7 + $0x58] sm:$0xff] %v791
    %808 = vst [vmem:[#allocation7 + $0x60] sm:$0xff] %v792
    %809 = vst [vmem:[#allocation7 + $0x68] sm:$0xff] %v793
    %810 = vst [vmem:[#allocation7 + $0x70] sm:$0xff] %v794
    %811 = vst [vmem:[#allocation7 + $0x78] sm:$0xff] %v795
    // Predicated region
    $region22: #{tpu_custom_call.1} parent=1 // pred_check
      _
    $region23: #{tpu_custom_call.1} parent=1 // pred_check_branch
      %813 = sbr.rel (0) target = $region25
    $region24: #{tpu_custom_call.1} parent=1 // pred_region
      %s815 = ssub.s32 2048, 2048
      %816 = vsyncadd [#allocation4], %s815
      %s817 = sshll.u32 [#allocation7], 4
      %s818 = int_to_ptr.vmem [resolvable:$true] %s817
      %823 = dma.vmem_to_hbm [thread:$0]  %s818, 2048, %s3, [#allocation4], 512, 512, 32
    $region25: #{tpu_custom_call.1} parent=1 // pred_fallthru
      _
    // Predicated region
    $region26: #{tpu_custom_call.1} parent=1 // pred_check
      _
    $region27: #{tpu_custom_call.1} parent=1 // pred_check_branch
      %825 = sbr.rel (0) target = $region29
    $region28: #{tpu_custom_call.1} parent=1 // pred_region
      %826 = dma.done [#allocation4], 2048
    $region29: #{tpu_custom_call.1} parent=1 // pred_fallthru
      _
    %827 = vsyncpa [#allocation3], 1
    %828 = vsyncpa [#allocation6], 1
    %829 = vsyncpa [#allocation4], 1

</llo_original>
